<compile_context>
chip_gen: v5e
topology: v5e:2x2
jax: 0.10.0
libtpu: 0.0.40
codegen_flags: <defaults>
</compile_context>

<pallas_src>
import functools
import math

import jax
import jax.numpy as jnp
from jax.experimental import pallas as pl
from jax.experimental.pallas import tpu as pltpu


# ----------------------------- tile / VMEM sizing -----------------------------

def _vmem_caps():
    """Returns (per-step live-bytes budget, vmem_limit_bytes)."""
    try:
        cap = int(pltpu.get_tpu_info().vmem_capacity_bytes)
    except Exception:
        cap = 64 * 1024 * 1024  # conservative default (v7x has 64 MiB per TC)
    limit = max(32 << 20, min(int(cap * 0.7), cap - (8 << 20)))
    budget = int(cap * 0.35)
    return budget, limit


def _fused_step_bytes(n, n_pad, gdep, tile_t, c, in_item, out_item):
    """VMEM live bytes per grid step, including intermediates (review fix)."""
    g = gdep + 1
    f = tile_t * c
    lane_c = c if c % 128 == 0 else -(-c // 128) * 128   # C padded to 128 lanes
    x_blk = 2 * n * f * in_item                   # double-buffered x block
    p_blk = 2 * gdep * n_pad * n * in_item        # double-buffered (constant) P stack
    o_blk = 2 * n * tile_t * g * c * out_item     # double-buffered output block
    h_live = gdep * n_pad * f * 4                 # f32 stacked matmul result
    relayout = g * n * tile_t * lane_c * 4 + n * tile_t * g * c * 4
    return x_blk + p_blk + o_blk + h_live + relayout


def _choose_tile_t(B, N, n_pad, T, C, gdep, in_item, out_item, budget, x_cap):
    """Pick a time-tile.  Returns (tile_t, T_pad)."""
    # smallest tile_t multiple making (tile_t % 8 == 0) and (tile_t*C % 128 == 0)
    lane_unit = 128 // math.gcd(C, 128)
    u = (8 * lane_unit) // math.gcd(8, lane_unit)     # lcm(8, lane_unit)
    if T <= u:
        return T, T                                   # full-T block (equal-to-full rule)

    def fits(t):
        return (N * t * C * in_item <= x_cap
                and _fused_step_bytes(N, n_pad, gdep, t, C, in_item, out_item) <= budget)

    max_units = -(-T // u)
    cands = []
    for k in range(max_units, 0, -1):
        t = k * u
        if not fits(t):
            continue
        t_pad = -(-T // t) * t
        steps = B * (t_pad // t)
        cands.append((t, t_pad, steps, t_pad - T))
    if not cands:
        t = u
        return t, -(-T // t) * t
    # prefer >=2 total grid steps (v7x megacore), then least padding, then largest tile
    t, t_pad, _, _ = max(cands, key=lambda c: (c[2] >= 2, -c[3], c[0]))
    return t, t_pad


# ------------------------------ hop matrices -----------------------------------

def _hop_matrices(adj, gdep, alpha, n_pad):
    """Stacked per-hop propagation matrices P_1..P_gdep, rows zero-padded to n_pad.

    h_i = alpha*x + (1-alpha)*A_norm^T @ h_{i-1}  ==>  h_i = P_i @ x  (h_0 = x).
    """
    N = adj.shape[0]
    a = adj.astype(jnp.float32) + jnp.eye(N, dtype=jnp.float32)
    a = a / jnp.sum(a, axis=1, keepdims=True)
    a_t = a.T
    eye = jnp.eye(N, dtype=jnp.float32)
    p = eye
    mats = []
    for _ in range(gdep):
        p = alpha * eye + (1.0 - alpha) * jnp.dot(
            a_t, p, precision=jax.lax.Precision.HIGHEST)
        mats.append(jnp.pad(p, ((0, n_pad - N), (0, 0))) if n_pad != N else p)
    return jnp.concatenate(mats, axis=0)              # (gdep * n_pad, N)


# --------------------------------- kernels ------------------------------------

def _fused_kernel(p_ref, x_ref, o_ref, *, gdep, n, n_pad, tile_t, c):
    """One stacked MXU matmul per grid step; one full-width store of all hops."""
    x = x_ref[0]                                                     # (N, tile_t*C)
    h = jnp.dot(p_ref[...], x, preferred_element_type=jnp.float32)  # (gdep*Np, tile_t*C)
    parts = [x.reshape(n, tile_t, c).astype(o_ref.dtype)]           # hop 0 == x exactly
    for i in range(gdep):
        hi = h[i * n_pad:i * n_pad + n, :]
        parts.append(hi.reshape(n, tile_t, c).astype(o_ref.dtype))
    o_ref[0] = jnp.concatenate(parts, axis=-1)                      # (N, tile_t, G*C)


def _split_kernel(p_ref, x_ref, o_ref, *, gdep, n, n_pad):
    """Fallback: pure 2-D stores per hop; interleave finished by one XLA pass."""
    x = x_ref[0]                                                     # (N, tile_f)
    o_ref[0, 0] = x.astype(o_ref.dtype)
    h = jnp.dot(p_ref[...], x, preferred_element_type=jnp.float32)  # (gdep*Np, tile_f)
    for i in range(gdep):
        o_ref[0, i + 1] = h[i * n_pad:i * n_pad + n, :].astype(o_ref.dtype)


# ------------------------------ pallas_call builders ---------------------------

def _build_fused_call(B, N, n_pad, T_pad, C, gdep, tile_t, out_dtype, vmem_limit):
    G = gdep + 1
    F = tile_t * C
    kernel = functools.partial(_fused_kernel, gdep=gdep, n=N, n_pad=n_pad,
                               tile_t=tile_t, c=C)
    return pl.pallas_call(
        kernel,
        out_shape=jax.ShapeDtypeStruct((B, N, T_pad, G * C), out_dtype),
        grid_spec=pltpu.PrefetchScalarGridSpec(
            num_scalar_prefetch=0,
            grid=(B, T_pad // tile_t),
            in_specs=[
                pl.BlockSpec((gdep * n_pad, N), lambda b, j: (0, 0)),   # P stack (resident)
                pl.BlockSpec((1, N, F), lambda b, j: (b, 0, j)),        # x feature slab
            ],
            out_specs=pl.BlockSpec((1, N, tile_t, G * C), lambda b, j: (b, 0, j, 0)),
        ),
        compiler_params=pltpu.CompilerParams(
            dimension_semantics=("parallel", "parallel"),
            vmem_limit_bytes=vmem_limit,
        ),
    )


def _build_split_call(B, N, n_pad, T_pad, C, gdep, tile_t, out_dtype, vmem_limit):
    G = gdep + 1
    F_total = T_pad * C
    tile_f = tile_t * C
    kernel = functools.partial(_split_kernel, gdep=gdep, n=N, n_pad=n_pad)
    return pl.pallas_call(
        kernel,
        out_shape=jax.ShapeDtypeStruct((B, G, N, F_total), out_dtype),
        grid_spec=pltpu.PrefetchScalarGridSpec(
            num_scalar_prefetch=0,
            grid=(B, F_total // tile_f),
            in_specs=[
                pl.BlockSpec((gdep * n_pad, N), lambda b, j: (0, 0)),
                pl.BlockSpec((1, N, tile_f), lambda b, j: (b, 0, j)),
            ],
            out_specs=pl.BlockSpec((1, G, N, tile_f), lambda b, j: (b, 0, 0, j)),
        ),
        compiler_params=pltpu.CompilerParams(
            dimension_semantics=("parallel", "parallel"),
            vmem_limit_bytes=vmem_limit,
        ),
    )


@functools.lru_cache(maxsize=None)
def _fused_compiles(B, N, n_pad, T_pad, C, gdep, tile_t, io_name, vmem_limit):
    """One-time (per shape/config) compile probe for the fused layout kernel."""
    io = jnp.dtype(io_name)
    call = _build_fused_call(B, N, n_pad, T_pad, C, gdep, tile_t, io, vmem_limit)
    p_sds = jax.ShapeDtypeStruct((gdep * n_pad, N), io)
    x_sds = jax.ShapeDtypeStruct((B, N, T_pad * C), io)
    try:
        jax.jit(call).lower(p_sds, x_sds).compile()
        return True
    except Exception:
        # TODO(synk): narrow to Mosaic/XLA lowering exception types once stable.
        return False


# -------------------------------- wrapper --------------------------------------

@functools.partial(jax.jit, static_argnames=("gdep", "alpha", "io_dtype"))
def mixhop_conv(x, adj, gdep=3, alpha=0.0, io_dtype=None):
    """Pallas implementation of MixhopConv.forward.

    x: (B, N, T, C), adj: (N, N) -> (B, N, T, (gdep+1)*C).
    io_dtype=jnp.bfloat16 enables bf16 I/O (f32 MXU accumulation) for ~2x less
    HBM traffic on this memory-bound op; default keeps the input dtype.
    """
    B, N, T, C = x.shape
    io = jnp.dtype(io_dtype) if io_dtype is not None else jnp.dtype(x.dtype)
    if gdep == 0:
        return x.astype(io)
    x = x.astype(io)

    n_pad = -(-N // 8) * 8
    p_stack = _hop_matrices(adj, gdep, float(alpha), n_pad).astype(io)

    item = io.itemsize
    budget, vmem_limit = _vmem_caps()
    tile_t, T_pad = _choose_tile_t(B, N, n_pad, T, C, gdep, item, item,
                                   budget, x_cap=4 << 20)
    if T_pad != T:
        x = jnp.pad(x, ((0, 0), (0, 0), (0, T_pad - T), (0, 0)))
    x2 = x.reshape(B, N, T_pad * C)          # free reshape: (T, C) contiguous

    G = gdep + 1
    if _fused_compiles(B, N, n_pad, T_pad, C, gdep, tile_t, io.name, vmem_limit):
        out = _build_fused_call(B, N, n_pad, T_pad, C, gdep, tile_t,
                                io, vmem_limit)(p_stack, x2)
    else:
        # Guaranteed-lowering path: dense per-hop 2-D writes + one fused XLA
        # transpose pass to reach the final hop-interleaved layout.
        out = _build_split_call(B, N, n_pad, T_pad, C, gdep, tile_t,
                                io, vmem_limit)(p_stack, x2)
        out = out.reshape(B, G, N, T_pad, C).transpose(0, 2, 3, 1, 4)
        out = out.reshape(B, N, T_pad, G * C)
    if T_pad != T:
        out = out[:, :, :T, :]
    return out


def mixhop_conv_ref(x, adj, gdep=3, alpha=0.0):
    """Pure-JAX reference matching the PyTorch forward exactly."""
    N = adj.shape[0]
    a = adj + jnp.eye(N, dtype=adj.dtype)
    a = a / a.sum(axis=1)[:, None]
    h = x
    out = [h]
    for _ in range(gdep):
        h1 = jnp.einsum("bntc,nm->bmtc", h, a)
        h = alpha * x + (1 - alpha) * h1
        out.append(h)
    return jnp.concatenate(out, axis=-1)


if __name__ == "__main__":
    B, N, T, C = 2, 16, 8, 32
    key = jax.random.PRNGKey(0)
    kx, ka = jax.random.split(key)
    x = jax.random.normal(kx, (B, N, T, C), dtype=jnp.float32)
    adj = jax.random.uniform(ka, (N, N), dtype=jnp.float32)

    # Module defaults (gdep=3, alpha=0).
    out = jax.block_until_ready(mixhop_conv(x, adj, gdep=3, alpha=0.0))
    ref = mixhop_conv_ref(x, adj, gdep=3, alpha=0.0)
    assert out.shape == (B, N, T, 4 * C), out.shape
    assert jnp.allclose(out, ref, atol=1e-4, rtol=1e-4), "mismatch (gdep=3, alpha=0)"

    # Non-default config exercises the alpha blend folded into the hop matrices.
    out2 = jax.block_until_ready(mixhop_conv(x, adj, gdep=2, alpha=0.05))
    ref2 = mixhop_conv_ref(x, adj, gdep=2, alpha=0.05)
    assert out2.shape == (B, N, T, 3 * C), out2.shape
    assert jnp.allclose(out2, ref2, atol=1e-4, rtol=1e-4), "mismatch (gdep=2, alpha=0.05)"

    print("KERNEL_OK")
</pallas_src>

<mosaic_0001>
module attributes {stable_mosaic.version = 11 : i64} {
  func.func @_split_kernel(%arg0: i32, %arg1: i32, %arg2: memref<48x16xf32, #tpu.memory_space<vmem>>, %arg3: memref<1x16x256xf32, #tpu.memory_space<vmem>>, %arg4: memref<1x4x16x256xf32, #tpu.memory_space<vmem>>) attributes {dimension_semantics = [#tpu.dimension_semantics<parallel>, #tpu.dimension_semantics<parallel>], iteration_bounds = array<i64: 2, 1>, scalar_prefetch = 0 : i64, scratch_operands = 0 : i64, tpu.core_type = #tpu.core_type<tc>, window_params = [{pipeline_mode = #tpu.pipeline_mode<synchronous>, transform_indices = @transform_0, window_bounds = array<i64: 48, 16>}, {transform_indices = @transform_1, window_bounds = array<i64: 1, 16, 256>}, {transform_indices = @transform_2, window_bounds = array<i64: 1, 4, 16, 256>}]} {
    %c0 = arith.constant 0 : index
    %c0_0 = arith.constant 0 : index
    %c0_1 = arith.constant 0 : index
    %0 = vector.load %arg3[%c0, %c0_0, %c0_1] : memref<1x16x256xf32, #tpu.memory_space<vmem>>, vector<1x16x256xf32>
    %1 = vector.shape_cast %0 : vector<1x16x256xf32> to vector<16x256xf32>
    %c0_2 = arith.constant 0 : index
    %c0_3 = arith.constant 0 : index
    %c0_4 = arith.constant 0 : index
    %c0_5 = arith.constant 0 : index
    %2 = vector.load %arg4[%c0_2, %c0_3, %c0_4, %c0_5] : memref<1x4x16x256xf32, #tpu.memory_space<vmem>>, vector<1x1x16x256xf32>
    %3 = vector.shape_cast %2 : vector<1x1x16x256xf32> to vector<16x256xf32>
    %4 = vector.shape_cast %1 : vector<16x256xf32> to vector<1x1x16x256xf32>
    tpu.vector_store %arg4[%c0_2, %c0_3, %c0_4, %c0_5], %4 {strides = array<i32>} : memref<1x4x16x256xf32, #tpu.memory_space<vmem>>, vector<1x1x16x256xf32>,
    %c0_6 = arith.constant 0 : index
    %c0_7 = arith.constant 0 : index
    %5 = vector.load %arg2[%c0_6, %c0_7] : memref<48x16xf32, #tpu.memory_space<vmem>>, vector<48x16xf32>
    %cst = arith.constant dense<0.000000e+00> : vector<48x256xf32>
    %6 = tpu.matmul %5, %1, %cst {dimension_numbers = #tpu.dot_dimension_numbers<[1], [0], [0], [1], [0, 0, 1, 1], [], []>} : vector<48x16xf32>, vector<16x256xf32>, vector<48x256xf32> -> vector<48x256xf32>
    %7 = vector.extract_strided_slice %6 {offsets = [0, 0], sizes = [16, 256], strides = [1, 1]} : vector<48x256xf32> to vector<16x256xf32>
    %c0_8 = arith.constant 0 : index
    %c1 = arith.constant 1 : index
    %c0_9 = arith.constant 0 : index
    %c0_10 = arith.constant 0 : index
    %8 = vector.load %arg4[%c0_8, %c1, %c0_9, %c0_10] : memref<1x4x16x256xf32, #tpu.memory_space<vmem>>, vector<1x1x16x256xf32>
    %9 = vector.shape_cast %8 : vector<1x1x16x256xf32> to vector<16x256xf32>
    %10 = vector.shape_cast %7 : vector<16x256xf32> to vector<1x1x16x256xf32>
    tpu.vector_store %arg4[%c0_8, %c1, %c0_9, %c0_10], %10 {strides = array<i32>} : memref<1x4x16x256xf32, #tpu.memory_space<vmem>>, vector<1x1x16x256xf32>,
    %11 = vector.extract_strided_slice %6 {offsets = [16, 0], sizes = [16, 256], strides = [1, 1]} : vector<48x256xf32> to vector<16x256xf32>
    %c0_11 = arith.constant 0 : index
    %c2 = arith.constant 2 : index
    %c0_12 = arith.constant 0 : index
    %c0_13 = arith.constant 0 : index
    %12 = vector.load %arg4[%c0_11, %c2, %c0_12, %c0_13] : memref<1x4x16x256xf32, #tpu.memory_space<vmem>>, vector<1x1x16x256xf32>
    %13 = vector.shape_cast %12 : vector<1x1x16x256xf32> to vector<16x256xf32>
    %14 = vector.shape_cast %11 : vector<16x256xf32> to vector<1x1x16x256xf32>
    tpu.vector_store %arg4[%c0_11, %c2, %c0_12, %c0_13], %14 {strides = array<i32>} : memref<1x4x16x256xf32, #tpu.memory_space<vmem>>, vector<1x1x16x256xf32>,
    %15 = vector.extract_strided_slice %6 {offsets = [32, 0], sizes = [16, 256], strides = [1, 1]} : vector<48x256xf32> to vector<16x256xf32>
    %c0_14 = arith.constant 0 : index
    %c3 = arith.constant 3 : index
    %c0_15 = arith.constant 0 : index
    %c0_16 = arith.constant 0 : index
    %16 = vector.load %arg4[%c0_14, %c3, %c0_15, %c0_16] : memref<1x4x16x256xf32, #tpu.memory_space<vmem>>, vector<1x1x16x256xf32>
    %17 = vector.shape_cast %16 : vector<1x1x16x256xf32> to vector<16x256xf32>
    %18 = vector.shape_cast %15 : vector<16x256xf32> to vector<1x1x16x256xf32>
    tpu.vector_store %arg4[%c0_14, %c3, %c0_15, %c0_16], %18 {strides = array<i32>} : memref<1x4x16x256xf32, #tpu.memory_space<vmem>>, vector<1x1x16x256xf32>,
    return
  }
  func.func @transform_0(%arg0: i32, %arg1: i32) -> (i32, i32) {
    %c0_i32 = arith.constant 0 : i32
    %c0_i32_0 = arith.constant 0 : i32
    %c0_i32_1 = arith.constant 0 : i32
    return %c0_i32, %c0_i32_0 : i32, i32
  }
  func.func @transform_1(%arg0: i32, %arg1: i32) -> (i32, i32, i32) {
    %c0_i32 = arith.constant 0 : i32
    %c0_i32_0 = arith.constant 0 : i32
    return %arg0, %c0_i32, %arg1 : i32, i32, i32
  }
  func.func @transform_2(%arg0: i32, %arg1: i32) -> (i32, i32, i32, i32) {
    %c0_i32 = arith.constant 0 : i32
    %c0_i32_0 = arith.constant 0 : i32
    %c0_i32_1 = arith.constant 0 : i32
    return %arg0, %c0_i32, %c0_i32_0, %arg1 : i32, i32, i32, i32
  }
}

</mosaic_0001>

<llo_original>
// kernel: mixhop_conv.1
$region0: #{mixhop_conv.1}
  #allocation0 [shape = 'u32[]', space=smem, size = 0x4, offset = 0x4, fixed_abs, tag = 'smem constant byte address 0x4 - core index']
  #allocation1 [shape = 'u32[72,128]{1,0:T(1,128)}', space=vmem, size = 0x9000, scoped, tag = 'internal scratch']
  %s0 = inlined_call_operand.vmem [shape: f32[48,16], index: 0, kind: input, shape index: {}]
  %s1 = inlined_call_operand.vmem [shape: f32[2,16,256], index: 1, kind: input, shape index: {}]
  %s2 = inlined_call_operand.vmem [shape: f32[2,4,16,256], index: 2, kind: output, shape index: {}]
  %s3 = sld [smem:[#allocation0]]
  $region41: #{mixhop_conv.1} parent=0
    _
  %s5 = ssub.s32 1, %s3
  %s6 = scalar_select 0, %s5, %s3
  loop: start=0, step=1, limit=4
  $region2: #{mixhop_conv.1} parent=0 // loop_pre_header
    _
  $region3: #{mixhop_conv.1} parent=0 // loop_header
    %s8 = sphi 0, %s12
    %p9 = scmp.ge.s32.totalorder %s8, 4
    %s15 = sphi 0, %s27
    %s16 = sphi 0, %s23
    %s17 = sphi 0, %s15
    %s18 = sphi 0, %s16
    %s19 = sphi 0, %s17
    %s20 = sphi 0, %s18
    %s28 = sphi 0, %s28
    %s30 = sphi 0, %s28
    %s31 = sphi 0, %s30
    %s45 = sphi 0, %s31
    %s53 = sphi 0, %s55
    %s56 = sphi 0, %s53
    %s57 = sphi 0, %s56
    %s73 = sphi 0, %s57
    %s81 = sphi 0, %s83
    %s84 = sphi 0, %s81
    %s85 = sphi 0, %s84
    %s101 = sphi 0, %s85
  $region4: #{mixhop_conv.1} parent=0 // loop_header_branch
    %11 = sbr.rel (%p9) target = $region8
  $region5: #{mixhop_conv.1} parent=0 // loop_body
    %s13 = ssub.s32 %s8, 1
    %s14 = ssub.s32 %s8, 2
    %s21 = sadd.s32 1, %s16
    %p22 = scmp.ge.s32.totalorder %s21, 1
    %s23 = scalar_select %p22, 0, %s21
    %s24 = sadd.s32 1, %s15
    %s25 = scalar_select %p22, %s24, %s15
    %p26 = scmp.ge.s32.totalorder %s25, 2
    %s27 = scalar_select %p26, 0, %s25
    %s29 = sadd.s32 %s28, 1
    %p32 = scmp.eq.s32.totalorder %s8, 1
    %p33 = scmp.ne.s32.totalorder %s28, %s30
    %p34 = scmp.eq.s32.totalorder %s8, 0
    %p35 = por %p33, %p34
    %p36 = scmp.ne.s32.totalorder %s28, %s30
    %p37 = scmp.eq.s32.totalorder %s13, 1
    %p38 = por %p36, %p37
    %p39 = scmp.ne.s32.totalorder %s30, %s31
    %p40 = scmp.eq.s32.totalorder %s13, 0
    %p41 = por %p39, %p40
    %p42 = scmp.ne.s32.totalorder %s30, %s31
    %p43 = scmp.eq.s32.totalorder %s14, 1
    %p44 = por %p42, %p43
    %p46 = scmp.ne.s32.totalorder %s31, %s45
    %p47 = scmp.eq.s32.totalorder %s14, 0
    %p48 = por %p46, %p47
    %s49 = ssub.s32 %s15, %s27
    %s50 = ssub.s32 %s16, %s23
    %s51 = sor.u32 %s49, %s50
    %p52 = scmp.eq.s32.totalorder %s51, 0
    %s54 = sadd.s32 %s53, 1
    %s55 = scalar_select %p52, %s53, %s54
    %p58 = pneg %p52
    %p59 = scmp.eq.s32.totalorder %s8, 1
    %p60 = por %p58, %p59
    %p61 = scmp.ne.s32.totalorder %s53, %s56
    %p62 = scmp.eq.s32.totalorder %s8, 0
    %p63 = por %p61, %p62
    %p64 = scmp.ne.s32.totalorder %s53, %s56
    %p65 = scmp.eq.s32.totalorder %s13, 1
    %p66 = por %p64, %p65
    %p67 = scmp.ne.s32.totalorder %s56, %s57
    %p68 = scmp.eq.s32.totalorder %s13, 0
    %p69 = por %p67, %p68
    %p70 = scmp.ne.s32.totalorder %s56, %s57
    %p71 = scmp.eq.s32.totalorder %s14, 1
    %p72 = por %p70, %p71
    %p74 = scmp.ne.s32.totalorder %s57, %s73
    %p75 = scmp.eq.s32.totalorder %s14, 0
    %p76 = por %p74, %p75
    %s77 = ssub.s32 %s15, %s27
    %s78 = ssub.s32 %s16, %s23
    %s79 = sor.u32 %s77, %s78
    %p80 = scmp.eq.s32.totalorder %s79, 0
    %s82 = sadd.s32 %s81, 1
    %s83 = scalar_select %p80, %s81, %s82
    %p86 = pneg %p80
    %p87 = scmp.eq.s32.totalorder %s8, 1
    %p88 = por %p86, %p87
    %p89 = scmp.ne.s32.totalorder %s81, %s84
    %p90 = scmp.eq.s32.totalorder %s8, 0
    %p91 = por %p89, %p90
    %p92 = scmp.ne.s32.totalorder %s81, %s84
    %p93 = scmp.eq.s32.totalorder %s13, 1
    %p94 = por %p92, %p93
    %p95 = scmp.ne.s32.totalorder %s84, %s85
    %p96 = scmp.eq.s32.totalorder %s13, 0
    %p97 = por %p95, %p96
    %p98 = scmp.ne.s32.totalorder %s84, %s85
    %p99 = scmp.eq.s32.totalorder %s14, 1
    %p100 = por %p98, %p99
    %p102 = scmp.ne.s32.totalorder %s85, %s101
    %p103 = scmp.eq.s32.totalorder %s14, 0
    %p104 = por %p102, %p103
    %p105 = scmp.le.s32.totalorder 1, %s8
    %p106 = scmp.lt.s32.totalorder %s8, 3
    %p107 = pnand %p105, %p106
    %p108 = pneg %p107
    // Predicated region
    $region9: #{mixhop_conv.1} parent=5 // pred_check
      _
    $region10: #{mixhop_conv.1} parent=5 // pred_check_branch
      %110 = sbr.rel (%p107) target = $region12
    $region11: #{mixhop_conv.1} parent=5 // pred_region
      %s111 = ssub.s32 %s8, 1
      // Predicated region
      $region13: #{mixhop_conv.1} parent=11 // pred_check
        %p112 = pneg %p41
      $region14: #{mixhop_conv.1} parent=11 // pred_check_branch
        %114 = sbr.rel (%p112) target = $region16
      $region15: #{mixhop_conv.1} parent=11 // pred_region
        _
      $region16: #{mixhop_conv.1} parent=11 // pred_fallthru
        _
    $region12: #{mixhop_conv.1} parent=5 // pred_fallthru
      _
    %p115 = scmp.lt.s32.totalorder %s8, 2
    // Predicated region
    $region17: #{mixhop_conv.1} parent=5 // pred_check
      %p116 = pneg %p115
    $region18: #{mixhop_conv.1} parent=5 // pred_check_branch
      %118 = sbr.rel (%p116) target = $region20
    $region19: #{mixhop_conv.1} parent=5 // pred_region
      // Predicated region
      $region21: #{mixhop_conv.1} parent=19 // pred_check
        %p119 = pneg %p63
      $region22: #{mixhop_conv.1} parent=19 // pred_check_branch
        %121 = sbr.rel (%p119) target = $region24
      $region23: #{mixhop_conv.1} parent=19 // pred_region
        %s122 = smul.u32 2, %s16
        %p123 = scmp.lt.s32.totalorder %s15, 1
        %s124 = scalar_select %p123, %s15, 1
        %p125 = scmp.lt.s32.totalorder %s122, 1
        %s126 = scalar_select %p125, %s122, 1
        %s127 = smul.addr %s124, 4
        %s128 = sadd.s32 %s126, %s127
        %s129 = smul.addr %s128, 8
        %s130 = scalar_lea.vmem %s1, %s129
        %s131 = smul.u32 2, %s16
      $region24: #{mixhop_conv.1} parent=19 // pred_fallthru
        _
    $region20: #{mixhop_conv.1} parent=5 // pred_fallthru
      _
    %p132 = scmp.le.s32.totalorder 1, %s8
    %p133 = scmp.lt.s32.totalorder %s8, 3
    %p134 = pnand %p132, %p133
    %p135 = pneg %p134
    // Predicated region
    $region25: #{mixhop_conv.1} parent=5 // pred_check
      _
    $region26: #{mixhop_conv.1} parent=5 // pred_check_branch
      %137 = sbr.rel (%p134) target = $region28
    $region27: #{mixhop_conv.1} parent=5 // pred_region
      %s138 = ssub.s32 %s8, 1
      %p139 = pneg %p41
      %p140 = pneg %p38
      %s141 = smul.u32 2, %s18
      %p142 = scmp.lt.s32.totalorder %s17, 1
      %s143 = scalar_select %p142, %s17, 1
      %p144 = scmp.lt.s32.totalorder %s141, 1
      %s145 = scalar_select %p144, %s141, 1
      %s146 = smul.addr %s143, 4
      %s147 = sadd.s32 %s145, %s146
      %s148 = smul.addr %s147, 8
      %s149 = scalar_lea.vmem %s1, %s148
      %p150 = pneg %p69
      %p151 = pneg %p66
      %p152 = pneg %p97
      %p153 = pneg %p94
      %s154 = smul.u32 2, %s18
      %p155 = scmp.lt.s32.totalorder %s17, 1
      %s156 = scalar_select %p155, %s17, 1
      %p157 = scmp.lt.s32.totalorder %s154, 1
      %s158 = scalar_select %p157, %s154, 1
      %s159 = smul.addr %s156, 16
      %s160 = sadd.s32 %s158, %s159
      %s161 = smul.addr %s160, 8
      %s162 = scalar_lea.vmem %s2, %s161
      %s163 = smul.u32 2, %s18
      %p164 = scmp.lt.s32.totalorder %s17, 1
      %s165 = scalar_select %p164, %s17, 1
      %p166 = scmp.lt.s32.totalorder %s163, 1
      %s167 = scalar_select %p166, %s163, 1
      %s168 = smul.addr %s165, 4
      %s169 = sadd.s32 %s167, %s168
      %s170 = smul.addr %s169, 8
      %s171 = scalar_lea.vmem %s1, %s170
      %s172 = smul.u32 2, %s18
      %s173 = smul.u32 2, %s18
      %p174 = scmp.lt.s32.totalorder %s17, 1
      %s175 = scalar_select %p174, %s17, 1
      %p176 = scmp.lt.s32.totalorder %s173, 1
      %s177 = scalar_select %p176, %s173, 1
      %s178 = smul.addr %s175, 16
      %s179 = sadd.s32 %s177, %s178
      %s180 = smul.addr %s179, 8
      %s181 = scalar_lea.vmem %s2, %s180
      %s182 = smul.u32 2, %s18
      %v183 = vld [vmem:[%s171] sm:$0xff]
      %v184 = vld [vmem:[%s171 + $0x8] sm:$0xff]
      %v185 = vld [vmem:[%s171 + $0x10] sm:$0xff]
      %v186 = vld [vmem:[%s171 + $0x18] sm:$0xff]
      %187 = vst [vmem:[%s181] sm:$0xff] %v183
      %188 = vst [vmem:[%s181 + $0x8] sm:$0xff] %v184
      %189 = vst [vmem:[%s181 + $0x10] sm:$0xff] %v185
      %190 = vst [vmem:[%s181 + $0x18] sm:$0xff] %v186
      %v191 = vld [vmem:[%s0] sm:$0xff]
      %v192 = vld [vmem:[%s0 + $0x8] sm:$0xff]
      %v193 = vld [vmem:[%s0 + $0x10] sm:$0xff]
      %v194 = vld [vmem:[%s0 + $0x18] sm:$0xff]
      %v195 = vld [vmem:[%s0 + $0x20] sm:$0xff]
      %v196 = vld [vmem:[%s0 + $0x28] sm:$0xff]
      %vm197 = vcmask 130048
      %v199 = vsel %vm197, %v191, 0
      %v202 = vsel %vm197, %v192, 0
      %v205 = vsel %vm197, %v193, 0
      %v208 = vsel %vm197, %v194, 0
      %v211 = vsel %vm197, %v195, 0
      %v214 = vsel %vm197, %v196, 0
      %216 = vmatpush.msra.mxu0 0.0
      %217 = vmatpush.msra.mxu0 0.0
      %218 = vmatpush.msra.mxu0 0.0
      %219 = vmatpush.msra.mxu0 0.0
      %220 = vmatpush.msra.mxu0 0.0
      %221 = vmatpush.msra.mxu0 0.0
      %222 = vmatpush.msra.mxu0 0.0
      %223 = vmatpush.msra.mxu0 0.0
      %224 = vmatpush.msra.mxu0 0.0
      %225 = vmatpush.msra.mxu0 0.0
      %226 = vmatpush.msra.mxu0 0.0
      %227 = vmatpush.msra.mxu0 0.0
      %228 = vmatpush.msra.mxu0 0.0
      %229 = vmatpush.msra.mxu0 0.0
      %230 = vmatpush.msra.mxu0 %v185
      %231 = vmatpush.msra.mxu0 %v183
      %232 = vmatmul.f32.gmra.mxu0 %v199
      %v233 = vpop.f32.mrf.mxu0
      %v234 = vadd.f32 0.0, %v233
      %235 = vmatmul.f32.gmra.mxu0 %v202
      %v236 = vpop.f32.mrf.mxu0
      %v237 = vadd.f32 0.0, %v236
      %238 = vmatmul.f32.gmra.mxu0 %v205
      %v239 = vpop.f32.mrf.mxu0
      %v240 = vadd.f32 0.0, %v239
      %241 = vmatmul.f32.gmra.mxu0 %v208
      %v242 = vpop.f32.mrf.mxu0
      %v243 = vadd.f32 0.0, %v242
      %244 = vmatmul.f32.gmra.mxu0 %v211
      %v245 = vpop.f32.mrf.mxu0
      %v246 = vadd.f32 0.0, %v245
      %247 = vmatmul.f32.gmra.mxu0 %v214
      %v248 = vpop.f32.mrf.mxu0
      %v249 = vadd.f32 0.0, %v248
      %250 = vdwg.mxu0
      %251 = vmatpush.msra.mxu0 0.0
      %252 = vmatpush.msra.mxu0 0.0
      %253 = vmatpush.msra.mxu0 0.0
      %254 = vmatpush.msra.mxu0 0.0
      %255 = vmatpush.msra.mxu0 0.0
      %256 = vmatpush.msra.mxu0 0.0
      %257 = vmatpush.msra.mxu0 0.0
      %258 = vmatpush.msra.mxu0 0.0
      %259 = vmatpush.msra.mxu0 0.0
      %260 = vmatpush.msra.mxu0 0.0
      %261 = vmatpush.msra.mxu0 0.0
      %262 = vmatpush.msra.mxu0 0.0
      %263 = vmatpush.msra.mxu0 0.0
      %264 = vmatpush.msra.mxu0 0.0
      %265 = vmatpush.msra.mxu0 %v186
      %266 = vmatpush.msra.mxu0 %v184
      %267 = vmatmul.f32.gmra.mxu0 %v199
      %v268 = vpop.f32.mrf.mxu0
      %v269 = vadd.f32 0.0, %v268
      %270 = vmatmul.f32.gmra.mxu0 %v202
      %v271 = vpop.f32.mrf.mxu0
      %v272 = vadd.f32 0.0, %v271
      %273 = vmatmul.f32.gmra.mxu0 %v205
      %v274 = vpop.f32.mrf.mxu0
      %v275 = vadd.f32 0.0, %v274
      %276 = vmatmul.f32.gmra.mxu0 %v208
      %v277 = vpop.f32.mrf.mxu0
      %v278 = vadd.f32 0.0, %v277
      %279 = vmatmul.f32.gmra.mxu0 %v211
      %v280 = vpop.f32.mrf.mxu0
      %v281 = vadd.f32 0.0, %v280
      %282 = vmatmul.f32.gmra.mxu0 %v214
      %v283 = vpop.f32.mrf.mxu0
      %v284 = vadd.f32 0.0, %v283
      %285 = vdwg.mxu0
      %s286 = scalar_lea.vmem %s181, 32
      %287 = vst [vmem:[%s286] sm:$0xff] %v234
      %288 = vst [vmem:[%s286 + $0x8] sm:$0xff] %v269
      %289 = vst [vmem:[%s286 + $0x10] sm:$0xff] %v237
      %290 = vst [vmem:[%s286 + $0x18] sm:$0xff] %v272
      %s291 = scalar_lea.vmem %s181, 64
      %292 = vst [vmem:[%s291] sm:$0xff] %v240
      %293 = vst [vmem:[%s291 + $0x8] sm:$0xff] %v275
      %294 = vst [vmem:[%s291 + $0x10] sm:$0xff] %v243
      %295 = vst [vmem:[%s291 + $0x18] sm:$0xff] %v278
      %s296 = scalar_lea.vmem %s181, 96
      %297 = vst [vmem:[%s296] sm:$0xff] %v246
      %298 = vst [vmem:[%s296 + $0x8] sm:$0xff] %v281
      %299 = vst [vmem:[%s296 + $0x10] sm:$0xff] %v249
      %300 = vst [vmem:[%s296 + $0x18] sm:$0xff] %v284
      %s301 = smul.u32 2, %s18
      %p302 = scmp.lt.s32.totalorder %s17, 1
      %s303 = scalar_select %p302, %s17, 1
      %p304 = scmp.lt.s32.totalorder %s301, 1
      %s305 = scalar_select %p304, %s301, 1
      %s306 = smul.addr %s303, 16
      %s307 = sadd.s32 %s305, %s306
      %s308 = smul.addr %s307, 8
      %s309 = scalar_lea.vmem %s2, %s308
      // Predicated region
      $region29: #{mixhop_conv.1} parent=27 // pred_check
        %p310 = pneg %p94
      $region30: #{mixhop_conv.1} parent=27 // pred_check_branch
        %312 = sbr.rel (%p310) target = $region32
      $region31: #{mixhop_conv.1} parent=27 // pred_region
        %s313 = smul.u32 2, %s18
      $region32: #{mixhop_conv.1} parent=27 // pred_fallthru
        _
    $region28: #{mixhop_conv.1} parent=5 // pred_fallthru
      _
    %p314 = scmp.le.s32.totalorder 2, %s8
    // Predicated region
    $region33: #{mixhop_conv.1} parent=5 // pred_check
      %p315 = pneg %p314
    $region34: #{mixhop_conv.1} parent=5 // pred_check_branch
      %317 = sbr.rel (%p315) target = $region36
    $region35: #{mixhop_conv.1} parent=5 // pred_region
      %s318 = ssub.s32 %s8, 2
      // Predicated region
      $region37: #{mixhop_conv.1} parent=35 // pred_check
        %p319 = pneg %p100
      $region38: #{mixhop_conv.1} parent=35 // pred_check_branch
        %321 = sbr.rel (%p319) target = $region40
      $region39: #{mixhop_conv.1} parent=35 // pred_region
        %s322 = smul.u32 2, %s20
        %p323 = scmp.lt.s32.totalorder %s19, 1
        %s324 = scalar_select %p323, %s19, 1
        %p325 = scmp.lt.s32.totalorder %s322, 1
        %s326 = scalar_select %p325, %s322, 1
        %s327 = smul.addr %s324, 16
        %s328 = sadd.s32 %s326, %s327
        %s329 = smul.addr %s328, 8
        %s330 = scalar_lea.vmem %s2, %s329
      $region40: #{mixhop_conv.1} parent=35 // pred_fallthru
        _
    $region36: #{mixhop_conv.1} parent=5 // pred_fallthru
      _
  $region6: #{mixhop_conv.1} parent=0 // loop_footer
    %s12 = sadd.s32 1, %s8
  $region7: #{mixhop_conv.1} parent=0 // loop_footer_branch
    %7 = sbr.rel target = $region3
  $region8: #{mixhop_conv.1} parent=0 // loop_exit
    _

</llo_original>
